<compile_context>
chip_gen: v5e
topology: v5e:2x2
jax: 0.10.0
libtpu: 0.0.40
codegen_flags: <defaults>
</compile_context>

<pallas_src>
import functools

import jax
import jax.numpy as jnp
import numpy as np
from jax import lax
from jax.experimental import pallas as pl
from jax.experimental.pallas import tpu as pltpu


def _comp_loss_kernel(x_ref, t_ref, part_ref, *, gamma, num_classes, hw, tile_n,
                      needs_mask, hard_onehot):
    """One (batch b, lane-tile i) step.

    x_ref, t_ref : [C, tile_n] logits / one-hot target (batch dim squeezed).
    part_ref     : [2, tile_n] per-batch partial sums (row 0 = CE, row 1 = focal);
                   resident across the i axis, written back once per batch.
    """
    i = pl.program_id(1)

    @pl.when(i == 0)
    def _init():
        part_ref[...] = jnp.zeros_like(part_ref)

    x = x_ref[...].astype(jnp.float32)   # [C, TN] logits
    t = t_ref[...].astype(jnp.float32)   # [C, TN] one-hot target

    if needs_mask:
        lane = lax.broadcasted_iota(jnp.int32, (1, tile_n), 1)
        valid = (i * tile_n + lane) < hw                      # [1, TN] lane validity
        x = jnp.where(valid, x, 0.0)                          # keep softmax finite
        t = jnp.where(valid, t, 0.0)                          # zero CE contribution

    # log-softmax over the channel axis (axis 0)
    m = jnp.max(x, axis=0, keepdims=True)
    z = x - m
    lse = jnp.log(jnp.sum(jnp.exp(z), axis=0, keepdims=True))
    logp = z - lse                                            # [C, TN]

    # --- loss1: CrossEntropyLoss with probability (one-hot) targets ---
    ce = -jnp.sum(t * logp, axis=0, keepdims=True)            # [1, TN]

    # --- loss2: FocalLoss: nll at argmax(target, dim=channel) ---
    if hard_onehot:
        # For exact one-hot targets, -logp[argmax(t)] == -sum(t * logp) bit-for-bit.
        nll = ce
    else:
        max_t = jnp.max(t, axis=0, keepdims=True)
        is_max = t >= max_t
        iota = lax.broadcasted_iota(jnp.int32, t.shape, 0)    # [C, TN]
        # first index achieving the max (matches torch.argmax tie-breaking)
        first_idx = jnp.min(jnp.where(is_max, iota, num_classes), axis=0, keepdims=True)
        sel = iota == first_idx                               # one-hot of argmax
        nll = -jnp.sum(jnp.where(sel, logp, 0.0), axis=0, keepdims=True)  # [1, TN]

    pt = jnp.exp(-nll)
    one_m_pt = 1.0 - pt
    if float(gamma).is_integer() and gamma > 0:
        mod = one_m_pt
        for _ in range(int(gamma) - 1):
            mod = mod * one_m_pt                              # avoid pow (EUP log+exp)
    else:
        mod = one_m_pt ** gamma
    focal = mod * nll                                         # [1, TN]

    if needs_mask:
        ce = jnp.where(valid, ce, 0.0)
        focal = jnp.where(valid, focal, 0.0)

    part_ref[0:1, :] += ce
    part_ref[1:2, :] += focal


def _choose_tile_n(C, HW, in_dtype_bytes=4, budget_bytes=18 * 1024 * 1024,
                   max_tile=None):
    """Largest lane tile (multiple of 128) whose VMEM footprint (pipeline buffers +
    live f32 intermediates, sublane-padded to 8) fits a conservative budget that sits
    under the 32 MiB scoped-VMEM limit we request."""
    c_pad = ((C + 7) // 8) * 8
    per_lane = (2 * 2 * c_pad * in_dtype_bytes   # 2 inputs x 2 pipeline buffers
                + 2 * 8 * 4                      # [2, TN] output x 2 buffers (pad -> 8)
                + 4 * c_pad * 4                  # ~4 live [C, TN] f32 temps
                + 10 * 32)                       # ~10 live [1, TN] f32 row temps
    tile = max(128, (budget_bytes // per_lane) // 128 * 128)
    if max_tile is not None:
        tile = min(tile, max(128, (max_tile // 128) * 128))
    if HW <= tile:
        return HW                                # full-extent lane tile (always legal)
    return tile                                  # multiple of 128; remainder is masked


def composition_loss(logits_nchw, target_onehot_nchw, *, comp_rat=0.5, gamma=2,
                     max_tile_n=None, hard_onehot_target=True):
    assert logits_nchw.shape == target_onehot_nchw.shape
    B, C, H, W = logits_nchw.shape
    HW = H * W
    N = B * HW

    # Free, contiguous reshape (no transpose, no extra HBM traffic): NCHW -> [B, C, HW]
    x = logits_nchw.reshape(B, C, HW)
    t = target_onehot_nchw.reshape(B, C, HW)

    in_bytes = max(jnp.dtype(x.dtype).itemsize, jnp.dtype(t.dtype).itemsize)
    tile_n = _choose_tile_n(C, HW, in_dtype_bytes=in_bytes, max_tile=max_tile_n)
    n_tiles = pl.cdiv(HW, tile_n)
    needs_mask = (HW % tile_n) != 0

    kernel = functools.partial(
        _comp_loss_kernel,
        gamma=gamma,
        num_classes=C,
        hw=HW,
        tile_n=tile_n,
        needs_mask=needs_mask,
        hard_onehot=hard_onehot_target,
    )

    parts = pl.pallas_call(
        kernel,
        out_shape=jax.ShapeDtypeStruct((B, 2, tile_n), jnp.float32),
        grid_spec=pltpu.PrefetchScalarGridSpec(
            num_scalar_prefetch=0,
            grid=(B, n_tiles),
            in_specs=[
                # leading batch dim squeezed away; kernel body sees [C, tile_n]
                pl.BlockSpec((None, C, tile_n), lambda b, i: (b, 0, i)),
                pl.BlockSpec((None, C, tile_n), lambda b, i: (b, 0, i)),
            ],
            # per-batch partial sums; resident across the (arbitrary) lane-tile axis
            out_specs=pl.BlockSpec((None, 2, tile_n), lambda b, i: (b, 0, 0)),
        ),
        compiler_params=pltpu.CompilerParams(
            dimension_semantics=("parallel", "arbitrary"),
            vmem_limit_bytes=32 * 1024 * 1024,
        ),
    )(x, t)

    # Trivial final reduction over B*2*tile_n f32 (negligible vs. the main HBM read).
    ce_mean = jnp.sum(parts[:, 0, :]) / N
    fo_mean = jnp.sum(parts[:, 1, :]) / N
    return comp_rat * ce_mean + (1.0 - comp_rat) * fo_mean


def _reference_loss(logits, onehot, comp_rat=0.5, gamma=2):
    """Pure-JAX reference matching PyTorch semantics (CE soft-target + FocalLoss)."""
    logp = jax.nn.log_softmax(logits, axis=1)                 # [B, C, H, W]
    ce = -jnp.sum(onehot * logp, axis=1)                      # [B, H, W]
    labels = jnp.argmax(onehot, axis=1)                       # [B, H, W]
    nll = -jnp.take_along_axis(logp, labels[:, None], axis=1)[:, 0]
    pt = jnp.exp(-nll)
    focal = (1.0 - pt) ** gamma * nll
    return comp_rat * ce.mean() + (1.0 - comp_rat) * focal.mean()


if __name__ == "__main__":
    key = jax.random.PRNGKey(0)
    k1, k2 = jax.random.split(key)

    B, C, H, W = 2, 4, 16, 16
    logits = jax.random.normal(k1, (B, C, H, W), dtype=jnp.float32)
    labels = jax.random.randint(k2, (B, H, W), 0, C)
    onehot = jax.nn.one_hot(labels, C, axis=1, dtype=jnp.float32)  # [B, C, H, W]

    ref = jax.block_until_ready(_reference_loss(logits, onehot, comp_rat=0.5, gamma=2))

    # Fast path (one-hot targets: focal nll == ce, argmax reconstruction skipped).
    loss = composition_loss(logits, onehot, comp_rat=0.5, gamma=2,
                            hard_onehot_target=True)
    loss = jax.block_until_ready(loss)
    np.testing.assert_allclose(np.asarray(loss), np.asarray(ref), rtol=1e-5, atol=1e-6)

    # Soft-target path (in-kernel argmax reconstruction), same result for one-hot targets.
    loss_soft = composition_loss(logits, onehot, comp_rat=0.5, gamma=2,
                                 hard_onehot_target=False)
    loss_soft = jax.block_until_ready(loss_soft)
    np.testing.assert_allclose(np.asarray(loss_soft), np.asarray(ref), rtol=1e-5, atol=1e-6)

    # Multi-tile + masked-remainder path (HW = 324, tile_n forced to 128 -> 3 tiles).
    B2, C2, H2, W2 = 2, 4, 18, 18
    logits2 = jax.random.normal(jax.random.PRNGKey(1), (B2, C2, H2, W2), jnp.float32)
    labels2 = jax.random.randint(jax.random.PRNGKey(2), (B2, H2, W2), 0, C2)
    onehot2 = jax.nn.one_hot(labels2, C2, axis=1, dtype=jnp.float32)
    ref2 = jax.block_until_ready(_reference_loss(logits2, onehot2, comp_rat=0.5, gamma=2))
    loss2 = jax.block_until_ready(
        composition_loss(logits2, onehot2, comp_rat=0.5, gamma=2, max_tile_n=128))
    np.testing.assert_allclose(np.asarray(loss2), np.asarray(ref2), rtol=1e-5, atol=1e-6)

    print("KERNEL_OK")
</pallas_src>

<mosaic_0001>
module attributes {stable_mosaic.version = 11 : i64} {
  func.func @_comp_loss_kernel(%arg0: i32, %arg1: i32, %arg2: memref<1x4x256xf32, #tpu.memory_space<vmem>>, %arg3: memref<1x4x256xf32, #tpu.memory_space<vmem>>, %arg4: memref<1x2x256xf32, #tpu.memory_space<vmem>>) attributes {dimension_semantics = [#tpu.dimension_semantics<parallel>, #tpu.dimension_semantics<arbitrary>], iteration_bounds = array<i64: 2, 1>, scalar_prefetch = 0 : i64, scratch_operands = 0 : i64, tpu.core_type = #tpu.core_type<tc>, window_params = [{transform_indices = @transform_0, window_bounds = array<i64: 1, 4, 256>}, {transform_indices = @transform_1, window_bounds = array<i64: 1, 4, 256>}, {transform_indices = @transform_2, window_bounds = array<i64: 1, 2, 256>}]} {
    %c0_i32 = arith.constant 0 : i32
    %0 = arith.cmpi eq, %arg1, %c0_i32 : i32
    %1 = arith.extui %0 : i1 to i32
    %c0_i32_0 = arith.constant 0 : i32
    %2 = arith.cmpi ne, %1, %c0_i32_0 : i32
    scf.if %2 {
      %cst_22 = arith.constant 0.000000e+00 : f32
      %41 = vector.broadcast %cst_22 : f32 to vector<2x256xf32>
      %c0_23 = arith.constant 0 : index
      %c0_24 = arith.constant 0 : index
      %c0_25 = arith.constant 0 : index
      %42 = vector.load %arg4[%c0_23, %c0_24, %c0_25] : memref<1x2x256xf32, #tpu.memory_space<vmem>>, vector<1x2x256xf32>
      %43 = vector.shape_cast %42 : vector<1x2x256xf32> to vector<2x256xf32>
      %44 = vector.shape_cast %41 : vector<2x256xf32> to vector<1x2x256xf32>
      tpu.vector_store %arg4[%c0_23, %c0_24, %c0_25], %44 {strides = array<i32>} : memref<1x2x256xf32, #tpu.memory_space<vmem>>, vector<1x2x256xf32>,
    } else {
    }
    %c0 = arith.constant 0 : index
    %c0_1 = arith.constant 0 : index
    %c0_2 = arith.constant 0 : index
    %3 = vector.load %arg2[%c0, %c0_1, %c0_2] : memref<1x4x256xf32, #tpu.memory_space<vmem>>, vector<1x4x256xf32>
    %4 = vector.shape_cast %3 : vector<1x4x256xf32> to vector<4x256xf32>
    %c0_3 = arith.constant 0 : index
    %c0_4 = arith.constant 0 : index
    %c0_5 = arith.constant 0 : index
    %5 = vector.load %arg3[%c0_3, %c0_4, %c0_5] : memref<1x4x256xf32, #tpu.memory_space<vmem>>, vector<1x4x256xf32>
    %6 = vector.shape_cast %5 : vector<1x4x256xf32> to vector<4x256xf32>
    %cst = arith.constant dense<0xFF800000> : vector<256xf32>
    %7 = vector.multi_reduction <maximumf>, %4, %cst [0] : vector<4x256xf32> to vector<256xf32>
    %8 = vector.shape_cast %7 : vector<256xf32> to vector<1x256xf32>
    %9 = vector.broadcast %8 : vector<1x256xf32> to vector<4x256xf32>
    %10 = arith.subf %4, %9 : vector<4x256xf32>
    %11 = math.exp %10 : vector<4x256xf32>
    %cst_6 = arith.constant dense<0.000000e+00> : vector<256xf32>
    %12 = vector.multi_reduction <add>, %11, %cst_6 [0] : vector<4x256xf32> to vector<256xf32>
    %13 = vector.shape_cast %12 : vector<256xf32> to vector<1x256xf32>
    %14 = math.log %13 : vector<1x256xf32>
    %15 = vector.broadcast %14 : vector<1x256xf32> to vector<4x256xf32>
    %16 = arith.subf %10, %15 : vector<4x256xf32>
    %17 = arith.mulf %6, %16 : vector<4x256xf32>
    %cst_7 = arith.constant dense<0.000000e+00> : vector<256xf32>
    %18 = vector.multi_reduction <add>, %17, %cst_7 [0] : vector<4x256xf32> to vector<256xf32>
    %19 = vector.shape_cast %18 : vector<256xf32> to vector<1x256xf32>
    %cst_8 = arith.constant 0.000000e+00 : f32
    %20 = vector.broadcast %cst_8 : f32 to vector<1x256xf32>
    %21 = arith.subf %20, %19 : vector<1x256xf32>
    %cst_9 = arith.constant 0.000000e+00 : f32
    %22 = vector.broadcast %cst_9 : f32 to vector<1x256xf32>
    %23 = arith.subf %22, %21 : vector<1x256xf32>
    %24 = math.exp %23 : vector<1x256xf32>
    %cst_10 = arith.constant 1.000000e+00 : f32
    %25 = vector.broadcast %cst_10 : f32 to vector<1x256xf32>
    %26 = arith.subf %25, %24 : vector<1x256xf32>
    %27 = arith.mulf %26, %26 : vector<1x256xf32>
    %28 = arith.mulf %27, %21 : vector<1x256xf32>
    %c0_11 = arith.constant 0 : index
    %c0_12 = arith.constant 0 : index
    %c0_13 = arith.constant 0 : index
    %29 = vector.load %arg4[%c0_11, %c0_12, %c0_13] : memref<1x2x256xf32, #tpu.memory_space<vmem>>, vector<1x1x256xf32>
    %30 = vector.shape_cast %29 : vector<1x1x256xf32> to vector<1x256xf32>
    %31 = arith.addf %30, %21 : vector<1x256xf32>
    %c0_14 = arith.constant 0 : index
    %c0_15 = arith.constant 0 : index
    %c0_16 = arith.constant 0 : index
    %32 = vector.load %arg4[%c0_14, %c0_15, %c0_16] : memref<1x2x256xf32, #tpu.memory_space<vmem>>, vector<1x1x256xf32>
    %33 = vector.shape_cast %32 : vector<1x1x256xf32> to vector<1x256xf32>
    %34 = vector.shape_cast %31 : vector<1x256xf32> to vector<1x1x256xf32>
    tpu.vector_store %arg4[%c0_14, %c0_15, %c0_16], %34 {strides = array<i32>} : memref<1x2x256xf32, #tpu.memory_space<vmem>>, vector<1x1x256xf32>,
    %c0_17 = arith.constant 0 : index
    %c1 = arith.constant 1 : index
    %c0_18 = arith.constant 0 : index
    %35 = vector.load %arg4[%c0_17, %c1, %c0_18] : memref<1x2x256xf32, #tpu.memory_space<vmem>>, vector<1x1x256xf32>
    %36 = vector.shape_cast %35 : vector<1x1x256xf32> to vector<1x256xf32>
    %37 = arith.addf %36, %28 : vector<1x256xf32>
    %c0_19 = arith.constant 0 : index
    %c1_20 = arith.constant 1 : index
    %c0_21 = arith.constant 0 : index
    %38 = vector.load %arg4[%c0_19, %c1_20, %c0_21] : memref<1x2x256xf32, #tpu.memory_space<vmem>>, vector<1x1x256xf32>
    %39 = vector.shape_cast %38 : vector<1x1x256xf32> to vector<1x256xf32>
    %40 = vector.shape_cast %37 : vector<1x256xf32> to vector<1x1x256xf32>
    tpu.vector_store %arg4[%c0_19, %c1_20, %c0_21], %40 {strides = array<i32>} : memref<1x2x256xf32, #tpu.memory_space<vmem>>, vector<1x1x256xf32>,
    return
  }
  func.func @transform_0(%arg0: i32, %arg1: i32) -> (i32, i32, i32) {
    %c0_i32 = arith.constant 0 : i32
    %c0_i32_0 = arith.constant 0 : i32
    return %arg0, %c0_i32, %arg1 : i32, i32, i32
  }
  func.func @transform_1(%arg0: i32, %arg1: i32) -> (i32, i32, i32) {
    %c0_i32 = arith.constant 0 : i32
    %c0_i32_0 = arith.constant 0 : i32
    return %arg0, %c0_i32, %arg1 : i32, i32, i32
  }
  func.func @transform_2(%arg0: i32, %arg1: i32) -> (i32, i32, i32) {
    %c0_i32 = arith.constant 0 : i32
    %c0_i32_0 = arith.constant 0 : i32
    %c0_i32_1 = arith.constant 0 : i32
    return %arg0, %c0_i32, %c0_i32_0 : i32, i32, i32
  }
}

</mosaic_0001>

<llo_original>
// kernel: tpu_custom_call.1
$region0: #{tpu_custom_call.1}
  #allocation0 [shape = 'u32[]', space=smem, size = 0x4, offset = 0x4, fixed_abs, tag = 'smem constant byte address 0x4 - core index']
  #allocation1 [shape = 'u32[72,128]{1,0:T(1,128)}', space=vmem, size = 0x9000, scoped, tag = 'internal scratch']
  %s0 = inlined_call_operand.hbm [shape: f32[2,4,256], index: 0, kind: input, shape index: {}]
  %s1 = inlined_call_operand.hbm [shape: f32[2,4,256], index: 1, kind: input, shape index: {}]
  %s2 = inlined_call_operand.hbm [shape: f32[2,2,256], index: 2, kind: output, shape index: {}]
  %s3 = sld [smem:[#allocation0]]
  $region53: #{tpu_custom_call.1} parent=0
    _
  %s5 = ssub.s32 1, %s3
  %s6 = scalar_select 0, %s5, %s3
  $region1: #{tpu_custom_call.1} parent=0
    #allocation2 [shape = 'u8[8192]{0}', space=vmem, size = 0x2000, scoped, tag = 'input window, operand 0']
    #allocation3 [shape = 's32[2]{0}', space=sflag, size = 0x8, scoped, tag = 'scoped memory for tpu_custom_call.1']
    #allocation4 [shape = 's32[2]{0}', space=sflag, size = 0x8, scoped, tag = 'scoped memory for tpu_custom_call.1']
    #allocation5 [shape = 'u8[8192]{0}', space=vmem, size = 0x2000, scoped, tag = 'input window, operand 1']
    #allocation6 [shape = 's32[2]{0}', space=sflag, size = 0x8, scoped, tag = 'scoped memory for tpu_custom_call.1']
    #allocation7 [shape = 'u8[4096]{0}', space=vmem, size = 0x1000, scoped, tag = 'output window, operand 0']
    %7 = vsyncpa [#allocation3], 0
    %s8 = scalar_lea.sflag [#allocation3], 1
    %9 = vsyncpa %s8, 0
    %10 = vsyncpa [#allocation6], 0
    %s11 = scalar_lea.sflag [#allocation6], 1
    %12 = vsyncpa %s11, 0
    %13 = vsyncpa [#allocation4], 0
    %s14 = scalar_lea.sflag [#allocation4], 1
    %15 = vsyncpa %s14, 0
    loop: start=0, step=1, limit=4
    $region2: #{tpu_custom_call.1} parent=1 // loop_pre_header
      _
    $region3: #{tpu_custom_call.1} parent=1 // loop_header
      %s17 = sphi 0, %s21
      %p18 = scmp.ge.s32.totalorder %s17, 4
      %s24 = sphi 0, %s36
      %s25 = sphi 0, %s32
      %s26 = sphi 0, %s24
      %s27 = sphi 0, %s25
      %s28 = sphi 0, %s26
      %s29 = sphi 0, %s27
      %s41 = sphi 0, %s43
      %s44 = sphi 0, %s41
      %s45 = sphi 0, %s44
      %s61 = sphi 0, %s45
      %s69 = sphi 0, %s71
      %s72 = sphi 0, %s69
      %s73 = sphi 0, %s72
      %s89 = sphi 0, %s73
      %s95 = sphi 0, %s97
      %s98 = sphi 0, %s95
      %s99 = sphi 0, %s98
      %s115 = sphi 0, %s99
    $region4: #{tpu_custom_call.1} parent=1 // loop_header_branch
      %20 = sbr.rel (%p18) target = $region8
    $region5: #{tpu_custom_call.1} parent=1 // loop_body
      %s22 = ssub.s32 %s17, 1
      %s23 = ssub.s32 %s17, 2
      %s30 = sadd.s32 1, %s25
      %p31 = scmp.ge.s32.totalorder %s30, 1
      %s32 = scalar_select %p31, 0, %s30
      %s33 = sadd.s32 1, %s24
      %s34 = scalar_select %p31, %s33, %s24
      %p35 = scmp.ge.s32.totalorder %s34, 2
      %s36 = scalar_select %p35, 0, %s34
      %s37 = ssub.s32 %s24, %s36
      %s38 = ssub.s32 %s25, %s32
      %s39 = sor.u32 %s37, %s38
      %p40 = scmp.eq.s32.totalorder %s39, 0
      %s42 = sadd.s32 %s41, 1
      %s43 = scalar_select %p40, %s41, %s42
      %p46 = pneg %p40
      %p47 = scmp.eq.s32.totalorder %s17, 1
      %p48 = por %p46, %p47
      %p49 = scmp.ne.s32.totalorder %s41, %s44
      %p50 = scmp.eq.s32.totalorder %s17, 0
      %p51 = por %p49, %p50
      %p52 = scmp.ne.s32.totalorder %s41, %s44
      %p53 = scmp.eq.s32.totalorder %s22, 1
      %p54 = por %p52, %p53
      %p55 = scmp.ne.s32.totalorder %s44, %s45
      %p56 = scmp.eq.s32.totalorder %s22, 0
      %p57 = por %p55, %p56
      %p58 = scmp.ne.s32.totalorder %s44, %s45
      %p59 = scmp.eq.s32.totalorder %s23, 1
      %p60 = por %p58, %p59
      %p62 = scmp.ne.s32.totalorder %s45, %s61
      %p63 = scmp.eq.s32.totalorder %s23, 0
      %p64 = por %p62, %p63
      %s65 = ssub.s32 %s24, %s36
      %s66 = ssub.s32 %s25, %s32
      %s67 = sor.u32 %s65, %s66
      %p68 = scmp.eq.s32.totalorder %s67, 0
      %s70 = sadd.s32 %s69, 1
      %s71 = scalar_select %p68, %s69, %s70
      %p74 = pneg %p68
      %p75 = scmp.eq.s32.totalorder %s17, 1
      %p76 = por %p74, %p75
      %p77 = scmp.ne.s32.totalorder %s69, %s72
      %p78 = scmp.eq.s32.totalorder %s17, 0
      %p79 = por %p77, %p78
      %p80 = scmp.ne.s32.totalorder %s69, %s72
      %p81 = scmp.eq.s32.totalorder %s22, 1
      %p82 = por %p80, %p81
      %p83 = scmp.ne.s32.totalorder %s72, %s73
      %p84 = scmp.eq.s32.totalorder %s22, 0
      %p85 = por %p83, %p84
      %p86 = scmp.ne.s32.totalorder %s72, %s73
      %p87 = scmp.eq.s32.totalorder %s23, 1
      %p88 = por %p86, %p87
      %p90 = scmp.ne.s32.totalorder %s73, %s89
      %p91 = scmp.eq.s32.totalorder %s23, 0
      %p92 = por %p90, %p91
      %s93 = ssub.s32 %s24, %s36
      %p94 = scmp.eq.s32.totalorder %s93, 0
      %s96 = sadd.s32 %s95, 1
      %s97 = scalar_select %p94, %s95, %s96
      %p100 = pneg %p94
      %p101 = scmp.eq.s32.totalorder %s17, 1
      %p102 = por %p100, %p101
      %p103 = scmp.ne.s32.totalorder %s95, %s98
      %p104 = scmp.eq.s32.totalorder %s17, 0
      %p105 = por %p103, %p104
      %p106 = scmp.ne.s32.totalorder %s95, %s98
      %p107 = scmp.eq.s32.totalorder %s22, 1
      %p108 = por %p106, %p107
      %p109 = scmp.ne.s32.totalorder %s98, %s99
      %p110 = scmp.eq.s32.totalorder %s22, 0
      %p111 = por %p109, %p110
      %p112 = scmp.ne.s32.totalorder %s98, %s99
      %p113 = scmp.eq.s32.totalorder %s23, 1
      %p114 = por %p112, %p113
      %p116 = scmp.ne.s32.totalorder %s99, %s115
      %p117 = scmp.eq.s32.totalorder %s23, 0
      %p118 = por %p116, %p117
      %p119 = scmp.le.s32.totalorder 1, %s17
      %p120 = scmp.lt.s32.totalorder %s17, 3
      %p121 = pnand %p119, %p120
      %p122 = pneg %p121
      // Predicated region
      $region9: #{tpu_custom_call.1} parent=5 // pred_check
        _
      $region10: #{tpu_custom_call.1} parent=5 // pred_check_branch
        %124 = sbr.rel (%p121) target = $region12
      $region11: #{tpu_custom_call.1} parent=5 // pred_region
        %s125 = ssub.s32 %s17, 1
      $region12: #{tpu_custom_call.1} parent=5 // pred_fallthru
        _
      %p126 = scmp.lt.s32.totalorder %s17, 2
      // Predicated region
      $region13: #{tpu_custom_call.1} parent=5 // pred_check
        %p127 = pneg %p126
      $region14: #{tpu_custom_call.1} parent=5 // pred_check_branch
        %129 = sbr.rel (%p127) target = $region16
      $region15: #{tpu_custom_call.1} parent=5 // pred_region
        // Predicated region
        $region17: #{tpu_custom_call.1} parent=15 // pred_check
          %p130 = pneg %p51
        $region18: #{tpu_custom_call.1} parent=15 // pred_check_branch
          %132 = sbr.rel (%p130) target = $region20
        $region19: #{tpu_custom_call.1} parent=15 // pred_region
          %s133 = sand.u32 %s41, 1
          %s134 = scalar_lea.sflag [#allocation3], %s133
          %s135 = sand.u32 %s41, 1
          %s136 = smul.addr %s135, 8
          %s137 = scalar_lea.vmem [#allocation2], %s136
          %s138 = smul.u32 2, %s25
          %140 = vsyncadd %s134, 0
          %s141 = smul.addr %s24, 2
          %s142 = sadd.s32 %s138, %s141
          %s143 = smul.addr %s142, 4
          %s144 = scalar_lea.hbm %s0, %s143
          %s146 = sshll.u32 %s144, 4
          %s147 = int_to_ptr.hbm [resolvable:$true] %s146
          %s148 = sshll.u32 %s137, 4
          %s149 = int_to_ptr.vmem [resolvable:$true] %s148
          %151 = dma.hbm_to_vmem [thread:$0]  %s147, 128, %s149, %s134
        $region20: #{tpu_custom_call.1} parent=15 // pred_fallthru
          _
        // Predicated region
        $region21: #{tpu_custom_call.1} parent=15 // pred_check
          %p152 = pneg %p79
        $region22: #{tpu_custom_call.1} parent=15 // pred_check_branch
          %154 = sbr.rel (%p152) target = $region24
        $region23: #{tpu_custom_call.1} parent=15 // pred_region
          %s155 = sand.u32 %s69, 1
          %s156 = scalar_lea.sflag [#allocation6], %s155
          %s157 = sand.u32 %s69, 1
          %s158 = smul.addr %s157, 8
          %s159 = scalar_lea.vmem [#allocation5], %s158
          %s160 = smul.u32 2, %s25
          %162 = vsyncadd %s156, 0
          %s163 = smul.addr %s24, 2
          %s164 = sadd.s32 %s160, %s163
          %s165 = smul.addr %s164, 4
          %s166 = scalar_lea.hbm %s1, %s165
          %s168 = sshll.u32 %s166, 4
          %s169 = int_to_ptr.hbm [resolvable:$true] %s168
          %s170 = sshll.u32 %s159, 4
          %s171 = int_to_ptr.vmem [resolvable:$true] %s170
          %173 = dma.hbm_to_vmem [thread:$0]  %s169, 128, %s171, %s156
        $region24: #{tpu_custom_call.1} parent=15 // pred_fallthru
          _
      $region16: #{tpu_custom_call.1} parent=5 // pred_fallthru
        _
      %p174 = scmp.le.s32.totalorder 1, %s17
      %p175 = scmp.lt.s32.totalorder %s17, 3
      %p176 = pnand %p174, %p175
      %p177 = pneg %p176
      // Predicated region
      $region25: #{tpu_custom_call.1} parent=5 // pred_check
        _
      $region26: #{tpu_custom_call.1} parent=5 // pred_check_branch
        %179 = sbr.rel (%p176) target = $region28
      $region27: #{tpu_custom_call.1} parent=5 // pred_region
        %s180 = ssub.s32 %s17, 1
        %s181 = sand.u32 %s44, 1
        %s182 = scalar_lea.sflag [#allocation3], %s181
        %s183 = sand.u32 %s44, 1
        %s184 = smul.addr %s183, 8
        %s185 = scalar_lea.vmem [#allocation2], %s184
        // Predicated region
        $region29: #{tpu_custom_call.1} parent=27 // pred_check
          %p186 = pneg %p57
        $region30: #{tpu_custom_call.1} parent=27 // pred_check_branch
          %188 = sbr.rel (%p186) target = $region32
        $region31: #{tpu_custom_call.1} parent=27 // pred_region
          %190 = dma.done %s182, 128
        $region32: #{tpu_custom_call.1} parent=27 // pred_fallthru
          _
        %s191 = sand.u32 %s72, 1
        %s192 = scalar_lea.sflag [#allocation6], %s191
        %s193 = sand.u32 %s72, 1
        %s194 = smul.addr %s193, 8
        %s195 = scalar_lea.vmem [#allocation5], %s194
        // Predicated region
        $region33: #{tpu_custom_call.1} parent=27 // pred_check
          %p196 = pneg %p85
        $region34: #{tpu_custom_call.1} parent=27 // pred_check_branch
          %198 = sbr.rel (%p196) target = $region36
        $region35: #{tpu_custom_call.1} parent=27 // pred_region
          %200 = dma.done %s192, 128
        $region36: #{tpu_custom_call.1} parent=27 // pred_fallthru
          _
        %s201 = sand.u32 %s44, 1
        %s202 = scalar_lea.sflag [#allocation3], %s201
        %s203 = sand.u32 %s44, 1
        %s204 = smul.addr %s203, 8
        %s205 = scalar_lea.vmem [#allocation2], %s204
        %p206 = pneg %p57
        %p207 = pneg %p54
        %s208 = sand.u32 %s72, 1
        %s209 = scalar_lea.sflag [#allocation6], %s208
        %s210 = sand.u32 %s72, 1
        %s211 = smul.addr %s210, 8
        %s212 = scalar_lea.vmem [#allocation5], %s211
        %p213 = pneg %p85
        %p214 = pneg %p82
        %p215 = pneg %p111
        %p216 = pneg %p108
        %s217 = sand.u32 %s98, 1
        %s218 = scalar_lea.sflag [#allocation4], %s217
        %s219 = sand.u32 %s98, 1
        %s220 = smul.addr %s219, 4
        %s221 = scalar_lea.vmem [#allocation7], %s220
        %s222 = smul.u32 2, %s27
        %s223 = smul.u32 2, %s27
        %p224 = scmp.eq.s32.totalorder %s27, 0
        // Predicated region
        $region37: #{tpu_custom_call.1} parent=27 // pred_check
          %p225 = pneg %p224
        $region38: #{tpu_custom_call.1} parent=27 // pred_check_branch
          %227 = sbr.rel (%p225) target = $region40
        $region39: #{tpu_custom_call.1} parent=27 // pred_region
          %228 = vst [vmem:[%s221] sm:$0xf] 0.0
        $region40: #{tpu_custom_call.1} parent=27 // pred_fallthru
          _
        %v229 = vld [vmem:[%s185] sm:$0xff]
        %v230 = vld [vmem:[%s195] sm:$0xff]
        %232 = vst [vmem:[#allocation1] ss:$2 sm:$0xff] %v229
        %v233 = vld.sshfl [vmem:[#allocation1] sm:$0xff pattern:$0x75316420]
        %v234 = vld.sshfl [vmem:[#allocation1 + $0x8] sm:$0xff pattern:$0x75316420]
        %vm237 = vcmask 1043456
        %v238 = vsel %vm237, %v233, -inf
        %v239 = vrot.slane %v238, 4
        %v240 = vmax.f32 %v238, %v239
        %v241 = vrot.slane %v240, 2
        %v242 = vmax.f32 %v240, %v241
        %v243 = vrot.slane %v242, 1
        %v244 = vmax.f32 %v242, %v243
        %v245 = vsel %vm237, %v234, -inf
        %v246 = vrot.slane %v245, 4
        %v247 = vmax.f32 %v245, %v246
        %v248 = vrot.slane %v247, 2
        %v249 = vmax.f32 %v247, %v248
        %v250 = vrot.slane %v249, 1
        %v251 = vmax.f32 %v249, %v250
        %v254 = vrot.slane %v251, 4
        %v255 = vsel %vm237, %v244, %v254
        %v257 = vsub.f32 %v229, %v255
        %v258 = vmul.f32 %v257, 1.442695
        %v259 = vpow.pop %v258
        %261 = vst [vmem:[#allocation1] ss:$2 sm:$0xff] %v259
        %v262 = vld.sshfl [vmem:[#allocation1] sm:$0xff pattern:$0x75316420]
        %v263 = vld.sshfl [vmem:[#allocation1 + $0x8] sm:$0xff pattern:$0x75316420]
        %v266 = vsel %vm237, %v262, 0.0
        %v267 = vrot.slane %v266, 4
        %v268 = vadd.f32 %v266, %v267
        %v269 = vrot.slane %v268, 2
        %v270 = vadd.f32 %v268, %v269
        %v271 = vrot.slane %v270, 1
        %v272 = vadd.f32 %v270, %v271
        %v273 = vsel %vm237, %v263, 0.0
        %v274 = vrot.slane %v273, 4
        %v275 = vadd.f32 %v273, %v274
        %v276 = vrot.slane %v275, 2
        %v277 = vadd.f32 %v275, %v276
        %v278 = vrot.slane %v277, 1
        %v279 = vadd.f32 %v277, %v278
        %v280 = vlog2.pop %v272
        %v281 = vmul.f32 %v280, 0.6931472
        %v282 = vlog2.pop %v279
        %v283 = vmul.f32 %v282, 0.6931472
        %v286 = vrot.slane %v283, 4
        %v287 = vsel %vm237, %v281, %v286
        %v289 = vsub.f32 %v257, %v287
        %v290 = vmul.f32 %v230, %v289
        %292 = vst [vmem:[#allocation1] ss:$2 sm:$0xff] %v290
        %v293 = vld.sshfl [vmem:[#allocation1] sm:$0xff pattern:$0x75316420]
        %v294 = vld.sshfl [vmem:[#allocation1 + $0x8] sm:$0xff pattern:$0x75316420]
        %v297 = vsel %vm237, %v293, 0.0
        %v298 = vrot.slane %v297, 4
        %v299 = vadd.f32 %v297, %v298
        %v300 = vrot.slane %v299, 2
        %v301 = vadd.f32 %v299, %v300
        %v302 = vrot.slane %v301, 1
        %v303 = vadd.f32 %v301, %v302
        %v304 = vsel %vm237, %v294, 0.0
        %v305 = vrot.slane %v304, 4
        %v306 = vadd.f32 %v304, %v305
        %v307 = vrot.slane %v306, 2
        %v308 = vadd.f32 %v306, %v307
        %v309 = vrot.slane %v308, 1
        %v310 = vadd.f32 %v308, %v309
        %v311 = vsub.f32 0.0, %v303
        %v312 = vsub.f32 0.0, %v310
        %v313 = vsub.f32 0.0, %v311
        %v314 = vsub.f32 0.0, %v312
        %v315 = vmul.f32 %v313, 1.442695
        %v316 = vpow.pop %v315
        %v317 = vmul.f32 %v314, 1.442695
        %v318 = vpow.pop %v317
        %v319 = vsub.f32 1.0, %v316
        %v320 = vsub.f32 1.0, %v318
        %v321 = vmul.f32 %v319, %v319
        %v322 = vmul.f32 %v320, %v320
        %v323 = vmul.f32 %v321, %v311
        %v324 = vmul.f32 %v322, %v312
        %v325 = vld [vmem:[%s221] ss:$2 sm:$0x3]
        %v328 = vrot.slane %v312, 7
        %vm329 = vcmask 1040384
        %v330 = vsel %vm329, %v311, %v328
        %v332 = vadd.f32 %v325, %v330
        %v333 = vlaneseq
        %vm334 = vcmp.ge.s32.totalorder %v333, 0
        %vm335 = vcmp.lt.s32.totalorder %v333, 256
        %vm336 = vmand %vm334, %vm335
        %337 = vst.msk [vmem:[%s221] ss:$2 sm:$0x3] %vm336, %v332
        %s338 = scalar_lea.vmem %s221, 1 [#allocation7]
        %v339 = vld [vmem:[%s338] ss:$2 sm:$0x3]
        %v342 = vrot.slane %v324, 7
        %v343 = vsel %vm329, %v323, %v342
        %v345 = vadd.f32 %v339, %v343
        %346 = vst.msk [vmem:[%s338] ss:$2 sm:$0x3] %vm336, %v345
        %s347 = sand.u32 %s98, 1
        %s348 = scalar_lea.sflag [#allocation4], %s347
        %s349 = sand.u32 %s98, 1
        %s350 = smul.addr %s349, 4
        %s351 = scalar_lea.vmem [#allocation7], %s350
        // Predicated region
        $region41: #{tpu_custom_call.1} parent=27 // pred_check
          %p352 = pneg %p108
        $region42: #{tpu_custom_call.1} parent=27 // pred_check_branch
          %354 = sbr.rel (%p352) target = $region44
        $region43: #{tpu_custom_call.1} parent=27 // pred_region
          %356 = vsyncadd %s348, 0
          %s357 = smul.addr %s26, 2
          %s358 = smul.addr %s357, 2
          %s359 = scalar_lea.hbm %s2, %s358
          %s361 = sshll.u32 %s351, 4
          %s362 = int_to_ptr.vmem [resolvable:$true] %s361
          %s363 = sshll.u32 %s359, 4
          %s364 = int_to_ptr.hbm [resolvable:$true] %s363
          %366 = dma.vmem_to_hbm [thread:$0]  %s362, 64, %s364, %s348
        $region44: #{tpu_custom_call.1} parent=27 // pred_fallthru
          _
      $region28: #{tpu_custom_call.1} parent=5 // pred_fallthru
        _
      %p367 = scmp.le.s32.totalorder 2, %s17
      // Predicated region
      $region45: #{tpu_custom_call.1} parent=5 // pred_check
        %p368 = pneg %p367
      $region46: #{tpu_custom_call.1} parent=5 // pred_check_branch
        %370 = sbr.rel (%p368) target = $region48
      $region47: #{tpu_custom_call.1} parent=5 // pred_region
        %s371 = ssub.s32 %s17, 2
        // Predicated region
        $region49: #{tpu_custom_call.1} parent=47 // pred_check
          %p372 = pneg %p114
        $region50: #{tpu_custom_call.1} parent=47 // pred_check_branch
          %374 = sbr.rel (%p372) target = $region52
        $region51: #{tpu_custom_call.1} parent=47 // pred_region
          %s375 = sand.u32 %s99, 1
          %s376 = scalar_lea.sflag [#allocation4], %s375
          %s377 = sand.u32 %s99, 1
          %s378 = smul.addr %s377, 4
          %s379 = scalar_lea.vmem [#allocation7], %s378
          %381 = dma.done %s376, 64
        $region52: #{tpu_custom_call.1} parent=47 // pred_fallthru
          _
      $region48: #{tpu_custom_call.1} parent=5 // pred_fallthru
        _
    $region6: #{tpu_custom_call.1} parent=1 // loop_footer
      %s21 = sadd.s32 1, %s17
    $region7: #{tpu_custom_call.1} parent=1 // loop_footer_branch
      %16 = sbr.rel target = $region3
    $region8: #{tpu_custom_call.1} parent=1 // loop_exit
      _
    %382 = vsyncpa [#allocation3], 1
    %s383 = scalar_lea.sflag [#allocation3], 1
    %384 = vsyncpa %s383, 1
    %385 = vsyncpa [#allocation6], 1
    %s386 = scalar_lea.sflag [#allocation6], 1
    %387 = vsyncpa %s386, 1
    %388 = vsyncpa [#allocation4], 1
    %s389 = scalar_lea.sflag [#allocation4], 1
    %390 = vsyncpa %s389, 1

</llo_original>
